<compile_context>
chip_gen: v7x
topology: tpu7x:2x2x1
jax: 0.10.0
libtpu: 0.0.40
codegen_flags: <defaults>
</compile_context>

<pallas_src>
import warnings
from math import exp
from typing import Optional

import jax
import jax.numpy as jnp
from jax.experimental import pallas as pl
from jax.experimental.pallas import tpu as pltpu


# ----------------------------------------------------------------------------
# Scale-parameter solve (pure Python, identical to the PyTorch helper).
# ----------------------------------------------------------------------------
def get_scale_param(p, tol=1e-9) -> float:
    assert p != 0 and p != 1
    p = 1 - p
    a = 0.5 / (1 - p)
    err = 1 + tol
    while err > tol:
        a = p / (1 - exp(-1 / a))
        err = abs(p - (a - a * exp(-1 / a)))
    return a


# ----------------------------------------------------------------------------
# Per-generation configuration (block byte budget, VMEM limit, megacore).
# ----------------------------------------------------------------------------
def _tpu_generation() -> str:
    try:
        kind = jax.devices()[0].device_kind.lower()
    except Exception:  # pragma: no cover - non-TPU / odd backends
        return "unknown"
    if "v7" in kind or "7x" in kind:
        return "v7x"
    if "v6" in kind:
        return "v6e"
    if "v5" in kind and ("lite" in kind or "e" in kind):
        return "v5e"
    return "unknown"


def _gen_config():
    gen = _tpu_generation()
    if gen == "v6e":
        # 128 MiB physical VMEM; raise the 32 MiB scoped default for headroom.
        return {"target_bytes": 4 << 20, "vmem_limit": 64 << 20, "core_parallel": False}
    if gen == "v7x":
        # 64 MiB physical VMEM per TC; 4 MiB blocks (in x2 + out x2 ~ 16 MiB/core).
        return {"target_bytes": 4 << 20, "vmem_limit": 48 << 20, "core_parallel": True}
    # v5e / unknown: stay under the 16 MiB scoped-VMEM default.
    return {"target_bytes": 2 << 20, "vmem_limit": None, "core_parallel": False}


def _compiler_params(cfg, dimension_semantics):
    kw = {"dimension_semantics": dimension_semantics}
    if cfg["vmem_limit"]:
        kw["vmem_limit_bytes"] = cfg["vmem_limit"]
    return pltpu.CompilerParams(**kw)


def _batch_semantics(cfg, n_batch_blocks):
    if cfg["core_parallel"] and n_batch_blocks >= 2:
        return pltpu.CORE_PARALLEL
    return pltpu.PARALLEL


# ----------------------------------------------------------------------------
# Block-size heuristic: lane-dense, ~target_bytes per block, (8, 128)-legal.
# ----------------------------------------------------------------------------
def _choose_blocks(B, F, itemsize, target_bytes, max_tf=8192, max_tb=4096):
    # Feature (lane) block: full F preferred; otherwise a multiple of 128 that
    # still leaves room for >= 8 sublanes inside the byte budget.
    tf_cap = max(128, min(max_tf, (target_bytes // (8 * itemsize)) // 128 * 128))
    tf = F if F <= tf_cap else tf_cap
    # Batch (sublane) block: full B if small, else a multiple of 8 sized so a
    # block is ~target_bytes (double-buffered in+out stays inside the scoped
    # VMEM limit chosen per generation).
    rows_budget = max(8, (target_bytes // max(1, tf * itemsize)) // 8 * 8)
    tb_cap = min(max_tb, rows_budget)
    tb = B if B <= tb_cap else tb_cap
    return tb, tf


# ----------------------------------------------------------------------------
# Pallas kernels
# ----------------------------------------------------------------------------
def _random_cutoff_kernel(cutoff_ref, x_ref, o_ref):
    """Keep column f iff f < cutoff[row]; cutoff (int32) precomputed per row.

    Equivalent to the PyTorch `prob < uniform` with
    prob = 1 - exp(-(f+1)/(scale*F)): cutoff = #{c in 1..F : c < -scale*F*log1p(-u)}.
    Exp/log live in the wrapper (once per row); the kernel is int-only.
    """
    j = pl.program_id(1)                       # feature-tile index
    tb, tf = o_ref.shape
    col = jax.lax.broadcasted_iota(jnp.int32, (tb, tf), 1) + j * tf
    mask = col < cutoff_ref[...]               # (tb, 1) broadcasts across lanes
    o_ref[...] = jnp.where(mask, x_ref[...], 0)


def _first_k_kernel(k_ref, x_ref, o_ref):
    """Keep the first k feature columns; k arrives via scalar prefetch (SMEM)."""
    j = pl.program_id(1)
    tb, tf = o_ref.shape
    k = k_ref[0]
    start = j * tf

    @pl.when(start + tf <= k)
    def _():                                   # fully kept tile: straight copy
        o_ref[...] = x_ref[...]

    @pl.when(start >= k)
    def _():                                   # fully dropped tile: zeros only
        o_ref[...] = jnp.zeros_like(o_ref)     # (input block aliased, not read)

    @pl.when(jnp.logical_and(start < k, start + tf > k))
    def _():                                   # the one straddling tile
        col = jax.lax.broadcasted_iota(jnp.int32, (tb, tf), 1) + start
        o_ref[...] = jnp.where(col < k, x_ref[...], 0)


# ----------------------------------------------------------------------------
# Wrappers around pallas_call
# ----------------------------------------------------------------------------
def taildropout_random(x: jax.Array, cutoff: jax.Array) -> jax.Array:
    """cutoff: (B, 1) int32 = per-row number of kept leading features."""
    B, F = x.shape
    cfg = _gen_config()
    tb, tf = _choose_blocks(B, F, x.dtype.itemsize, cfg["target_bytes"])
    grid = (pl.cdiv(B, tb), pl.cdiv(F, tf))
    cost = pl.CostEstimate(flops=0, transcendentals=0,
                           bytes_accessed=int(2 * B * F * x.dtype.itemsize + 4 * B))

    def build(batch_sem):
        return pl.pallas_call(
            _random_cutoff_kernel,
            out_shape=jax.ShapeDtypeStruct((B, F), x.dtype),
            grid=grid,
            in_specs=[
                pl.BlockSpec((tb, 1), lambda i, j: (i, 0)),    # per-row cutoff
                pl.BlockSpec((tb, tf), lambda i, j: (i, j)),   # input tile
            ],
            out_specs=pl.BlockSpec((tb, tf), lambda i, j: (i, j)),
            compiler_params=_compiler_params(cfg, (batch_sem, pltpu.PARALLEL)),
            cost_estimate=cost,
        )

    batch_sem = _batch_semantics(cfg, grid[0])
    try:
        return build(batch_sem)(cutoff, x)
    except Exception:
        if batch_sem is pltpu.PARALLEL:
            raise
        return build(pltpu.PARALLEL)(cutoff, x)   # safe fallback if CORE_PARALLEL rejected


def taildropout_first_k(x: jax.Array, k: int) -> jax.Array:
    B, F = x.shape
    cfg = _gen_config()
    tb, tf = _choose_blocks(B, F, x.dtype.itemsize, cfg["target_bytes"])
    grid = (pl.cdiv(B, tb), pl.cdiv(F, tf))
    k_arr = jnp.asarray([k], dtype=jnp.int32)
    cost = pl.CostEstimate(flops=0, transcendentals=0,
                           bytes_accessed=int(2 * B * F * x.dtype.itemsize + 4))

    def x_index_map(i, j, k_ref):
        # Fully-dropped feature tiles alias to the LAST kept/straddle block, so
        # their input index equals the previous step's and the pipeline's
        # consecutive-identical-index skip suppresses the DMA entirely.
        kk = k_ref[0]
        last_kept = jnp.maximum((kk - 1) // tf, 0)
        return (i, jnp.where(j * tf >= kk, last_kept, j))

    def build(batch_sem):
        return pl.pallas_call(
            _first_k_kernel,
            out_shape=jax.ShapeDtypeStruct((B, F), x.dtype),
            grid_spec=pltpu.PrefetchScalarGridSpec(
                num_scalar_prefetch=1,
                grid=grid,
                in_specs=[pl.BlockSpec((tb, tf), x_index_map)],
                out_specs=pl.BlockSpec((tb, tf), lambda i, j, k_ref: (i, j)),
            ),
            # Feature axis ARBITRARY: the alias-and-skip trick relies on a
            # sequential j sweep per core; batch axis carries the parallelism.
            compiler_params=_compiler_params(cfg, (batch_sem, pltpu.ARBITRARY)),
            cost_estimate=cost,
        )

    batch_sem = _batch_semantics(cfg, grid[0])
    try:
        return build(batch_sem)(k_arr, x)
    except Exception:
        if batch_sem is pltpu.PARALLEL:
            raise
        return build(pltpu.PARALLEL)(k_arr, x)


# ----------------------------------------------------------------------------
# Module-like wrapper reproducing TailDropout.forward semantics
# (restricted to the default batch_dim=0 / dropout_dim=-1, 2D input).
# ----------------------------------------------------------------------------
class TailDropout:
    def __init__(self, p: float = 0.5, batch_dim: int = 0, dropout_dim: int = -1):
        if p < 0 or p > 1:
            raise ValueError(f"dropout probability has to be between 0 and 1, got {p}")
        if batch_dim == dropout_dim:
            raise ValueError("batch_dim and dropout_dim can't overlap")
        # TODO(synk): arbitrary batch_dim / dropout_dim lists would need an extra
        # reshape/transpose in glue; kernels support the module defaults (0, -1).
        self.batch_dim = batch_dim
        self.dropout_dim = dropout_dim
        self.training = True
        self.set_p(p)
        self.k = -1
        self._k_is_set = False

    def set_p(self, p) -> None:
        self._p = p
        self.scale = None if (p == 0 or p == 1) else get_scale_param(p)

    def set_k(self, k: Optional[int]):
        if k is None:
            self.k, self._k_is_set = -1, False
        else:
            self.k, self._k_is_set = int(k), True

    def train(self, mode=True):
        if self._k_is_set:
            warnings.warn(f"Calling .train() resets `self.k={self.k}` to None")
            self.set_k(None)
        self.training = mode
        return self

    def eval(self):
        if self._k_is_set:
            warnings.warn(f"Calling .eval() resets `self.k={self.k}` to None")
            self.set_k(None)
        self.training = False
        return self

    def __call__(self, x: jax.Array, key: Optional[jax.Array] = None) -> jax.Array:
        if not self._k_is_set:
            if self.training:
                mode = ("straight-through" if self._p == 0
                        else "zero" if self._p == 1 else "random")
            else:
                mode = "straight-through"
        else:
            mode = "first_k"

        if mode == "straight-through":
            return x
        if mode == "zero":
            # Write-only (half the HBM traffic of x*0).  NaN/Inf inputs no longer
            # propagate as they would with multiply-by-zero (torch parity caveat).
            return jnp.zeros_like(x)
        if mode == "random":
            assert key is not None, "random mode needs a PRNG key"
            B = x.shape[self.batch_dim]
            F = x.shape[self.dropout_dim]
            # noise_shape = replace_w_ones_except(shape, batch_dim) == (B, 1) for 2D.
            # Drawn in f32 so bf16 inputs keep full threshold precision.
            uniform = jax.random.uniform(key, (B, 1), dtype=jnp.float32)
            # prob[c] < u  <=>  c < -scale*F*log1p(-u) (c = 1..F); the kernel only
            # sees the integer count of kept columns -> exp/log once per row, and
            # no float column-index precision issues for huge F.
            threshold = (-self.scale * F) * jnp.log1p(-uniform)
            cutoff = jnp.clip(jnp.ceil(threshold) - 1.0, 0.0, float(F)).astype(jnp.int32)
            return taildropout_random(x, cutoff)
        if mode == "first_k":
            n_features = x.shape[self.dropout_dim]
            if self.k > n_features:
                raise ValueError(
                    f"TailDropout k ({self.k}) is greater than n_features ({n_features})")
            return taildropout_first_k(x, self.k)
        raise ValueError


# ----------------------------------------------------------------------------
# Demo / self-check (small deterministic shapes)
# ----------------------------------------------------------------------------
if __name__ == "__main__":
    key = jax.random.PRNGKey(0)
    kx, ku = jax.random.split(key)

    B, F = 16, 256
    x = jax.random.normal(kx, (B, F), dtype=jnp.float32)

    drop = TailDropout(p=0.5)

    # --- training / 'random' mode (Pallas kernel) ---
    y_rand = drop(x, key=ku)
    jax.block_until_ready(y_rand)

    # Exact reference of the integer-cutoff formulation the kernel implements.
    uniform = jax.random.uniform(ku, (B, 1), dtype=jnp.float32)
    threshold = (-drop.scale * F) * jnp.log1p(-uniform)
    cutoff = jnp.clip(jnp.ceil(threshold) - 1.0, 0.0, float(F)).astype(jnp.int32)
    col0 = jnp.arange(F, dtype=jnp.int32)
    ref_cut = jnp.where(col0[None, :] < cutoff, x, 0.0).astype(x.dtype)
    assert jnp.array_equal(y_rand, ref_cut), "random-mode kernel mismatch (cutoff ref)"

    # Against the original exp-based PyTorch formulation: allow at most one
    # boundary column per row to differ due to FP rounding in the reformulation.
    col1 = jnp.arange(1, F + 1, dtype=jnp.float32)
    prob = 1.0 - jnp.exp(-col1 / (drop.scale * F))
    ref_exp = x * (prob[None, :] < uniform).astype(x.dtype)
    n_mismatch = int(jnp.sum(y_rand != ref_exp))
    assert n_mismatch <= B, f"too many mismatches vs exp reference: {n_mismatch}"

    # --- eval / straight-through ---
    drop.eval()
    y_eval = drop(x)
    assert jnp.array_equal(y_eval, x)

    # --- 'zero' mode (p=1, training) ---
    drop_zero = TailDropout(p=1.0)
    y_zero = drop_zero(x)
    assert float(jnp.abs(y_zero).sum()) == 0.0

    # --- first_k mode (Pallas kernel), incl. edge cases k=0 and k=F ---
    for k in (0, 100, F):
        drop.set_k(k)
        y_k = drop(x)
        jax.block_until_ready(y_k)
        assert float(jnp.abs(y_k[:, k:]).sum()) == 0.0, f"first_k k={k}: tail not zero"
        assert jnp.array_equal(y_k[:, :k], x[:, :k]), f"first_k k={k}: head mismatch"

    print("KERNEL_OK")
</pallas_src>

<mosaic_0001>
module attributes {stable_mosaic.version = 11 : i64} {
  func.func @_random_cutoff_kernel(%arg0: i32, %arg1: i32, %arg2: memref<16x1xi32, #tpu.memory_space<vmem>>, %arg3: memref<16x256xf32, #tpu.memory_space<vmem>>, %arg4: memref<16x256xf32, #tpu.memory_space<vmem>>) attributes {dimension_semantics = [#tpu.dimension_semantics<parallel>, #tpu.dimension_semantics<parallel>], iteration_bounds = array<i64: 1, 1>, scalar_prefetch = 0 : i64, scratch_operands = 0 : i64, tpu.core_type = #tpu.core_type<tc>, window_params = [{transform_indices = @transform_0, window_bounds = array<i64: 16, 1>}, {transform_indices = @transform_1, window_bounds = array<i64: 16, 256>}, {transform_indices = @transform_2, window_bounds = array<i64: 16, 256>}]} {
    %0 = tpu.iota {dimensions = array<i32: 1>} : vector<16x256xi32>
    %c256_i32 = arith.constant 256 : i32
    %1 = arith.muli %arg1, %c256_i32 : i32
    %2 = vector.broadcast %1 : i32 to vector<16x256xi32>
    %3 = arith.addi %0, %2 : vector<16x256xi32>
    %c0 = arith.constant 0 : index
    %c0_0 = arith.constant 0 : index
    %4 = vector.load %arg2[%c0, %c0_0] : memref<16x1xi32, #tpu.memory_space<vmem>>, vector<16x1xi32>
    %5 = vector.broadcast %4 : vector<16x1xi32> to vector<16x256xi32>
    %6 = arith.cmpi slt, %3, %5 : vector<16x256xi32>
    %c0_1 = arith.constant 0 : index
    %c0_2 = arith.constant 0 : index
    %7 = vector.load %arg3[%c0_1, %c0_2] : memref<16x256xf32, #tpu.memory_space<vmem>>, vector<16x256xf32>
    %c0_i32 = arith.constant 0 : i32
    %8 = arith.sitofp %c0_i32 : i32 to f32
    %9 = vector.broadcast %8 : f32 to vector<16x256xf32>
    %10 = arith.select %6, %7, %9 : vector<16x256xi1>, vector<16x256xf32>
    %c0_3 = arith.constant 0 : index
    %c0_4 = arith.constant 0 : index
    %11 = vector.load %arg4[%c0_3, %c0_4] : memref<16x256xf32, #tpu.memory_space<vmem>>, vector<16x256xf32>
    tpu.vector_store %arg4[%c0_3, %c0_4], %10 {strides = array<i32>} : memref<16x256xf32, #tpu.memory_space<vmem>>, vector<16x256xf32>,
    return
  }
  func.func @transform_0(%arg0: i32, %arg1: i32) -> (i32, i32) {
    %c0_i32 = arith.constant 0 : i32
    %c0_i32_0 = arith.constant 0 : i32
    return %arg0, %c0_i32 : i32, i32
  }
  func.func @transform_1(%arg0: i32, %arg1: i32) -> (i32, i32) {
    %c0_i32 = arith.constant 0 : i32
    return %arg0, %arg1 : i32, i32
  }
  func.func @transform_2(%arg0: i32, %arg1: i32) -> (i32, i32) {
    %c0_i32 = arith.constant 0 : i32
    return %arg0, %arg1 : i32, i32
  }
}

</mosaic_0001>

<llo_original>
// kernel: tpu_custom_call.1
$region0: #{tpu_custom_call.1}
  #allocation0 [shape = 'u32[]', space=smem, size = 0x4, offset = 0x4, fixed_abs, tag = 'smem constant byte address 0x4 - core index']
  #allocation1 [shape = 'u32[144,128]{1,0:T(1,128)}', space=vmem, size = 0x12000, scoped, tag = 'internal scratch']
  %s0 = inlined_call_operand.vmem [shape: s32[16,1], index: 0, kind: input, shape index: {}]
  %s1 = inlined_call_operand.hbm [shape: f32[16,256], index: 1, kind: input, shape index: {}]
  %s2 = inlined_call_operand.hbm [shape: f32[16,256], index: 2, kind: output, shape index: {}]
  %s3 = sld [smem:[#allocation0]]
  $region22: #{tpu_custom_call.1} parent=0
    _
  %s5 = ssub.s32 1, %s3
  %s6 = scalar_select 0, %s5, %s3
  $region1: #{tpu_custom_call.1} parent=0
    #allocation2 [shape = 'u8[16384]{0}', space=vmem, size = 0x4000, scoped, tag = 'input window, operand 1, single buffered']
    #allocation3 [shape = 's32[1]{0}', space=sflag, size = 0x4, scoped, tag = 'scoped memory for tpu_custom_call.1']
    #allocation4 [shape = 's32[1]{0}', space=sflag, size = 0x4, scoped, tag = 'scoped memory for tpu_custom_call.1']
    #allocation5 [shape = 'u8[16384]{0}', space=vmem, size = 0x4000, scoped, tag = 'output window, operand 0, single buffered']
    %7 = vsyncpa [#allocation3], 0
    %8 = vsyncpa [#allocation4], 0
    // Predicated region
    $region2: #{tpu_custom_call.1} parent=1 // pred_check
      _
    $region3: #{tpu_custom_call.1} parent=1 // pred_check_branch
      %10 = sbr.rel (0) target = $region5
    $region4: #{tpu_custom_call.1} parent=1 // pred_region
      _
    $region5: #{tpu_custom_call.1} parent=1 // pred_fallthru
      _
    // Predicated region
    $region6: #{tpu_custom_call.1} parent=1 // pred_check
      _
    $region7: #{tpu_custom_call.1} parent=1 // pred_check_branch
      %12 = sbr.rel (0) target = $region9
    $region8: #{tpu_custom_call.1} parent=1 // pred_region
      %s14 = ssub.s32 512, 512
      %15 = vsyncadd [#allocation3], %s14
      %s16 = sshll.u32 [#allocation2], 4
      %s17 = int_to_ptr.vmem [resolvable:$true] %s16
      %22 = dma.hbm_to_vmem [thread:$0]  %s1, 512, %s17, [#allocation3], 256, 256, 16
    $region9: #{tpu_custom_call.1} parent=1 // pred_fallthru
      _
    // Predicated region
    $region10: #{tpu_custom_call.1} parent=1 // pred_check
      _
    $region11: #{tpu_custom_call.1} parent=1 // pred_check_branch
      %24 = sbr.rel (0) target = $region13
    $region12: #{tpu_custom_call.1} parent=1 // pred_region
      %25 = dma.done [#allocation3], 512
    $region13: #{tpu_custom_call.1} parent=1 // pred_fallthru
      _
    %v26 = vlaneseq
    %v27 = vand.u32 %v26, 127
    %v28 = vadd.s32 %v27, 128
    %s29 = smul.u32 0, 256
    %v30 = vstv %s29
    %v31 = vadd.s32 %v27, %v30
    %v32 = vadd.s32 %v28, %v30
    %v33 = vld [vmem:[%s0] sm:$0xff]
    %v34 = vld [vmem:[%s0 + $0x8] sm:$0xff]
    %35 = vset.pattern.permute.xlu0 0
    %36 = vperm.xlu0 %35, %v33
    %v37 = vpop.permute.xlu0 %36
    %38 = vset.pattern.permute.xlu0 0
    %39 = vperm.xlu0 %38, %v34
    %v40 = vpop.permute.xlu0 %39
    %vm41 = vcmp.lt.s32.totalorder %v31, %v37
    %vm42 = vcmp.lt.s32.totalorder %v32, %v37
    %vm43 = vcmp.lt.s32.totalorder %v31, %v40
    %vm44 = vcmp.lt.s32.totalorder %v32, %v40
    %v45 = vld [vmem:[#allocation2] sm:$0xff]
    %v46 = vld [vmem:[#allocation2 + $0x8] sm:$0xff]
    %v47 = vld [vmem:[#allocation2 + $0x10] sm:$0xff]
    %v48 = vld [vmem:[#allocation2 + $0x18] sm:$0xff]
    %v49 = vsel %vm41, %v45, 0.0
    %v50 = vsel %vm42, %v46, 0.0
    %v51 = vsel %vm43, %v47, 0.0
    %v52 = vsel %vm44, %v48, 0.0
    %53 = vst [vmem:[#allocation5] sm:$0xff] %v49
    %54 = vst [vmem:[#allocation5 + $0x8] sm:$0xff] %v50
    %55 = vst [vmem:[#allocation5 + $0x10] sm:$0xff] %v51
    %56 = vst [vmem:[#allocation5 + $0x18] sm:$0xff] %v52
    // Predicated region
    $region14: #{tpu_custom_call.1} parent=1 // pred_check
      _
    $region15: #{tpu_custom_call.1} parent=1 // pred_check_branch
      %58 = sbr.rel (0) target = $region17
    $region16: #{tpu_custom_call.1} parent=1 // pred_region
      %s60 = ssub.s32 512, 512
      %61 = vsyncadd [#allocation4], %s60
      %s62 = sshll.u32 [#allocation5], 4
      %s63 = int_to_ptr.vmem [resolvable:$true] %s62
      %68 = dma.vmem_to_hbm [thread:$0]  %s63, 512, %s2, [#allocation4], 256, 256, 16
    $region17: #{tpu_custom_call.1} parent=1 // pred_fallthru
      _
    // Predicated region
    $region18: #{tpu_custom_call.1} parent=1 // pred_check
      _
    $region19: #{tpu_custom_call.1} parent=1 // pred_check_branch
      %70 = sbr.rel (0) target = $region21
    $region20: #{tpu_custom_call.1} parent=1 // pred_region
      %71 = dma.done [#allocation4], 512
    $region21: #{tpu_custom_call.1} parent=1 // pred_fallthru
      _
    %72 = vsyncpa [#allocation3], 1
    %73 = vsyncpa [#allocation4], 1

</llo_original>
